<compile_context>
chip_gen: v7x
topology: tpu7x:2x2x1
jax: 0.10.0
libtpu: 0.0.40
codegen_flags: <defaults>
</compile_context>

<pallas_src>
import jax
import jax.numpy as jnp
from jax.experimental import pallas as pl
from jax.experimental.pallas import tpu as pltpu


IN_FEATURES = 28 * 28   # 784
HIDDEN = 128
OUT_FEATURES = 10


# --------------------------------------------------------------------------
# Helpers
# --------------------------------------------------------------------------
def _round_up(x, m):
    return ((x + m - 1) // m) * m


def _cdiv(a, b):
    return (a + b - 1) // b


def _padded_tile_bytes(shape, dtype):
    """Bytes a 2-D tile actually occupies in VMEM: the lane (last) dim pads to
    128 and the sublane dim pads to the native tile height (8 for 4-byte,
    16 for 2-byte dtypes)."""
    itm = jnp.dtype(dtype).itemsize
    sub = 8 if itm >= 4 else 32 // itm
    rows = shape[-2] if len(shape) >= 2 else 1
    cols = shape[-1]
    return _round_up(rows, sub) * _round_up(cols, 128) * itm


def _chip_profile():
    """Return (max batch tile, VMEM budget cap in bytes) per TPU generation."""
    try:
        kind = jax.devices()[0].device_kind.lower()
    except Exception:  # pragma: no cover - defensive
        kind = ""
    if "v7" in kind:                       # 64 MiB physical VMEM per TC
        return 3072, 48 * 1024 * 1024
    if "v5" in kind or "v6" in kind:       # 128 MiB physical VMEM
        return 8192, 96 * 1024 * 1024
    return 2048, 48 * 1024 * 1024          # unknown chip: stay conservative


# --------------------------------------------------------------------------
# Kernel
# --------------------------------------------------------------------------
def mlp_kernel(x_ref, w1_ref, b1_ref, w2_ref, b2_ref, o_ref):
    """Fused fc1 -> bias -> ReLU -> fc2 -> bias for one batch tile.

    x_ref:  (TB, 784)   f32 or bf16 (streamed as produced)
    w1_ref: (784, 128)  compute dtype (bf16 by default)
    b1_ref: (1, 128)    f32
    w2_ref: (128, 10)   compute dtype
    b2_ref: (1, 10)     f32
    o_ref:  (TB, 10)    f32
    """
    cdt = w1_ref.dtype
    # In-kernel cast to the MXU compute dtype (no extra HBM pass over x).
    x = x_ref[...].astype(cdt)
    # fc1 on the MXU, f32 accumulate; bias + ReLU on the VPU in f32.
    h = jnp.dot(x, w1_ref[...], preferred_element_type=jnp.float32) + b1_ref[...]
    h = jnp.maximum(h, 0.0)
    # fc2, f32 accumulate.
    y = (jnp.dot(h.astype(cdt), w2_ref[...],
                 preferred_element_type=jnp.float32)
         + b2_ref[...])
    o_ref[...] = y.astype(o_ref.dtype)


# --------------------------------------------------------------------------
# Wrapper
# --------------------------------------------------------------------------
def prepare_params(w1, b1, w2, b2, compute_dtype=jnp.bfloat16):
    """One-time weight prep (run OUTSIDE the hot path): cast W1/W2 to the MXU
    compute dtype; biases stay f32 and are reshaped to (1, N) for broadcast."""
    return (jnp.asarray(w1, compute_dtype),
            jnp.asarray(b1, jnp.float32).reshape(1, HIDDEN),
            jnp.asarray(w2, compute_dtype),
            jnp.asarray(b2, jnp.float32).reshape(1, OUT_FEATURES))


def neural_net_forward(x, params, *, block_batch=None, min_grid_steps=4):
    """x: (..., 28, 28) or (B, 784) -> logits (B, 10) float32.

    `params` comes from prepare_params.  x is streamed in its own dtype
    (pass bf16 from the producer to halve the dominant HBM stream); any
    cast to the compute dtype happens inside the kernel.
    """
    w1, b1, w2, b2 = params
    x_flat = x.reshape(-1, IN_FEATURES)            # == x.view(-1, 784)
    batch = x_flat.shape[0]

    x_itm = jnp.dtype(x_flat.dtype).itemsize
    sub = 8 if x_itm >= 4 else 32 // x_itm         # sublane multiple for batch tile

    max_tb, vmem_cap = _chip_profile()

    # ---- batch tile selection: guarantee a multi-step grid when possible ----
    if batch <= sub:
        tb = batch                                 # single full-extent block
    else:
        tb = _round_up(_cdiv(batch, min_grid_steps), sub)
        for cap in (max_tb, block_batch):
            if cap is not None:
                tb = min(tb, max(sub, (cap // sub) * sub))
        if tb >= batch:
            tb = batch

    # ---- padding-aware VMEM budget --------------------------------------
    def vmem_estimate(t):
        xb = _padded_tile_bytes((t, IN_FEATURES), x_flat.dtype)
        ob = _padded_tile_bytes((t, OUT_FEATURES), jnp.float32)
        wb = (_padded_tile_bytes(w1.shape, w1.dtype)
              + _padded_tile_bytes(b1.shape, b1.dtype)
              + _padded_tile_bytes(w2.shape, w2.dtype)
              + _padded_tile_bytes(b2.shape, b2.dtype))
        interm = 2 * _padded_tile_bytes((t, HIDDEN), jnp.float32)  # h + y/casts
        # x/out tiles are double-buffered; weights counted x2 conservatively.
        return 2 * (xb + ob) + 2 * wb + interm

    # Shrink the tile until it (with 25% headroom) fits the chip budget.
    while tb > sub and int(vmem_estimate(tb) * 1.25) > vmem_cap:
        nt = max(sub, _round_up(tb // 2, sub))
        if nt >= tb:
            break
        tb = nt

    grid = (_cdiv(batch, tb),)
    vmem_limit = min(vmem_cap,
                     max(32 * 1024 * 1024, int(vmem_estimate(tb) * 1.25)))

    # ---- scheduler hint ---------------------------------------------------
    flops = 2 * batch * IN_FEATURES * HIDDEN + 2 * batch * HIDDEN * OUT_FEATURES
    bytes_accessed = (batch * IN_FEATURES * x_itm
                      + batch * OUT_FEATURES * 4
                      + w1.size * jnp.dtype(w1.dtype).itemsize
                      + w2.size * jnp.dtype(w2.dtype).itemsize
                      + (b1.size + b2.size) * 4)

    return pl.pallas_call(
        mlp_kernel,
        out_shape=jax.ShapeDtypeStruct((batch, OUT_FEATURES), jnp.float32),
        grid_spec=pltpu.PrefetchScalarGridSpec(
            num_scalar_prefetch=0,
            grid=grid,
            in_specs=[
                # x streams tile-by-tile along the batch axis (double-buffered).
                pl.BlockSpec((tb, IN_FEATURES), lambda i: (i, 0)),
                # Weights / biases: constant block index -> fetched once,
                # VMEM-resident across all batch tiles.
                pl.BlockSpec((IN_FEATURES, HIDDEN), lambda i: (0, 0)),
                pl.BlockSpec((1, HIDDEN), lambda i: (0, 0)),
                pl.BlockSpec((HIDDEN, OUT_FEATURES), lambda i: (0, 0)),
                pl.BlockSpec((1, OUT_FEATURES), lambda i: (0, 0)),
            ],
            out_specs=pl.BlockSpec((tb, OUT_FEATURES), lambda i: (i, 0)),
        ),
        compiler_params=pltpu.CompilerParams(
            dimension_semantics=("parallel",),     # shard batch tiles over TCs
            vmem_limit_bytes=vmem_limit,
        ),
        cost_estimate=pl.CostEstimate(
            flops=flops, transcendentals=0, bytes_accessed=bytes_accessed),
    )(x_flat, w1, b1, w2, b2)


# --------------------------------------------------------------------------
# Init (mirrors nn.Linear's U(-1/sqrt(fan_in), 1/sqrt(fan_in)))
# --------------------------------------------------------------------------
def init_params(key):
    k1, k2, k3, k4 = jax.random.split(key, 4)
    lim1 = 1.0 / jnp.sqrt(jnp.float32(IN_FEATURES))
    lim2 = 1.0 / jnp.sqrt(jnp.float32(HIDDEN))
    # Stored as (in_features, out_features) so the kernel does x @ W.
    w1 = jax.random.uniform(k1, (IN_FEATURES, HIDDEN), jnp.float32, -lim1, lim1)
    b1 = jax.random.uniform(k2, (HIDDEN,), jnp.float32, -lim1, lim1)
    w2 = jax.random.uniform(k3, (HIDDEN, OUT_FEATURES), jnp.float32, -lim2, lim2)
    b2 = jax.random.uniform(k4, (OUT_FEATURES,), jnp.float32, -lim2, lim2)
    return w1, b1, w2, b2


if __name__ == "__main__":
    key = jax.random.PRNGKey(0)
    k_x, k_p = jax.random.split(key)
    w1, b1, w2, b2 = init_params(k_p)

    def ref_forward(xf):
        return jnp.maximum(xf @ w1 + b1, 0.0) @ w2 + b2

    # --- 1) Strict f32 path, single tile (B=8), tight tolerance ------------
    params_f32 = prepare_params(w1, b1, w2, b2, compute_dtype=jnp.float32)
    x1 = jax.random.normal(k_x, (8, 1, 28, 28), jnp.float32)
    out1 = jax.block_until_ready(neural_net_forward(x1, params_f32))
    ref1 = ref_forward(x1.reshape(8, IN_FEATURES))
    assert out1.shape == (8, OUT_FEATURES)
    assert jnp.allclose(out1, ref1, atol=1e-4, rtol=1e-4)

    # --- 2) Multi-tile f32 (B=24, TB=8 -> grid of 3): exercises the
    #        pipelined batch grid with VMEM-resident weights ----------------
    x2 = jax.random.normal(jax.random.PRNGKey(1), (24, 1, 28, 28), jnp.float32)
    out2 = jax.block_until_ready(
        neural_net_forward(x2, params_f32, block_batch=8))
    ref2 = ref_forward(x2.reshape(24, IN_FEATURES))
    assert jnp.allclose(out2, ref2, atol=1e-4, rtol=1e-4)

    # --- 3) Production default: bf16 weights, f32 x streamed and cast
    #        in-kernel; B=256 -> TB=64, grid of 4 (pipelined + megacore) ----
    params_bf16 = prepare_params(w1, b1, w2, b2)           # bf16 default
    x3 = jax.random.normal(jax.random.PRNGKey(2), (256, 1, 28, 28), jnp.float32)
    out3 = jax.block_until_ready(neural_net_forward(x3, params_bf16))
    ref3 = ref_forward(x3.reshape(256, IN_FEATURES))
    assert jnp.allclose(out3, ref3, atol=5e-2, rtol=5e-2)

    # --- 4) bf16 producer: x arrives in bf16, halving the dominant HBM
    #        x stream (no wrapper-side cast anywhere) ------------------------
    out4 = jax.block_until_ready(
        neural_net_forward(x3.astype(jnp.bfloat16), params_bf16))
    assert jnp.allclose(out4, ref3, atol=5e-2, rtol=5e-2)

    print("KERNEL_OK")
</pallas_src>

<mosaic_0001>
module attributes {stable_mosaic.version = 11 : i64} {
  func.func @mlp_kernel(%arg0: i32, %arg1: memref<8x784xf32, #tpu.memory_space<vmem>>, %arg2: memref<784x128xf32, #tpu.memory_space<vmem>>, %arg3: memref<1x128xf32, #tpu.memory_space<vmem>>, %arg4: memref<128x10xf32, #tpu.memory_space<vmem>>, %arg5: memref<1x10xf32, #tpu.memory_space<vmem>>, %arg6: memref<8x10xf32, #tpu.memory_space<vmem>>) attributes {dimension_semantics = [#tpu.dimension_semantics<parallel>], iteration_bounds = array<i64: 1>, scalar_prefetch = 0 : i64, scratch_operands = 0 : i64, tpu.core_type = #tpu.core_type<tc>, window_params = [{transform_indices = @transform_0, window_bounds = array<i64: 8, 784>}, {pipeline_mode = #tpu.pipeline_mode<synchronous>, transform_indices = @transform_1, window_bounds = array<i64: 784, 128>}, {pipeline_mode = #tpu.pipeline_mode<synchronous>, transform_indices = @transform_2, window_bounds = array<i64: 1, 128>}, {pipeline_mode = #tpu.pipeline_mode<synchronous>, transform_indices = @transform_3, window_bounds = array<i64: 128, 10>}, {pipeline_mode = #tpu.pipeline_mode<synchronous>, transform_indices = @transform_4, window_bounds = array<i64: 1, 10>}, {transform_indices = @transform_5, window_bounds = array<i64: 8, 10>}]} {
    %c0 = arith.constant 0 : index
    %c0_0 = arith.constant 0 : index
    %0 = vector.load %arg1[%c0, %c0_0] : memref<8x784xf32, #tpu.memory_space<vmem>>, vector<8x784xf32>
    %c0_1 = arith.constant 0 : index
    %c0_2 = arith.constant 0 : index
    %1 = vector.load %arg2[%c0_1, %c0_2] : memref<784x128xf32, #tpu.memory_space<vmem>>, vector<784x128xf32>
    %cst = arith.constant dense<0.000000e+00> : vector<8x128xf32>
    %2 = tpu.matmul %0, %1, %cst {dimension_numbers = #tpu.dot_dimension_numbers<[1], [0], [0], [1], [0, 0, 1, 1], [], []>} : vector<8x784xf32>, vector<784x128xf32>, vector<8x128xf32> -> vector<8x128xf32>
    %c0_3 = arith.constant 0 : index
    %c0_4 = arith.constant 0 : index
    %3 = vector.load %arg3[%c0_3, %c0_4] : memref<1x128xf32, #tpu.memory_space<vmem>>, vector<1x128xf32>
    %4 = vector.broadcast %3 : vector<1x128xf32> to vector<8x128xf32>
    %5 = arith.addf %2, %4 : vector<8x128xf32>
    %cst_5 = arith.constant 0.000000e+00 : f32
    %6 = vector.broadcast %cst_5 : f32 to vector<8x128xf32>
    %7 = arith.maximumf %5, %6 : vector<8x128xf32>
    %c0_6 = arith.constant 0 : index
    %c0_7 = arith.constant 0 : index
    %8 = vector.load %arg4[%c0_6, %c0_7] : memref<128x10xf32, #tpu.memory_space<vmem>>, vector<128x10xf32>
    %cst_8 = arith.constant dense<0.000000e+00> : vector<8x10xf32>
    %9 = tpu.matmul %7, %8, %cst_8 {dimension_numbers = #tpu.dot_dimension_numbers<[1], [0], [0], [1], [0, 0, 1, 1], [], []>} : vector<8x128xf32>, vector<128x10xf32>, vector<8x10xf32> -> vector<8x10xf32>
    %c0_9 = arith.constant 0 : index
    %c0_10 = arith.constant 0 : index
    %10 = vector.load %arg5[%c0_9, %c0_10] : memref<1x10xf32, #tpu.memory_space<vmem>>, vector<1x10xf32>
    %11 = vector.broadcast %10 : vector<1x10xf32> to vector<8x10xf32>
    %12 = arith.addf %9, %11 : vector<8x10xf32>
    %c0_11 = arith.constant 0 : index
    %c0_12 = arith.constant 0 : index
    %13 = vector.load %arg6[%c0_11, %c0_12] : memref<8x10xf32, #tpu.memory_space<vmem>>, vector<8x10xf32>
    tpu.vector_store %arg6[%c0_11, %c0_12], %12 {strides = array<i32>} : memref<8x10xf32, #tpu.memory_space<vmem>>, vector<8x10xf32>,
    return
  }
  func.func @transform_0(%arg0: i32) -> (i32, i32) {
    %c0_i32 = arith.constant 0 : i32
    %c0_i32_0 = arith.constant 0 : i32
    return %arg0, %c0_i32 : i32, i32
  }
  func.func @transform_1(%arg0: i32) -> (i32, i32) {
    %c0_i32 = arith.constant 0 : i32
    %c0_i32_0 = arith.constant 0 : i32
    %c0_i32_1 = arith.constant 0 : i32
    return %c0_i32, %c0_i32_0 : i32, i32
  }
  func.func @transform_2(%arg0: i32) -> (i32, i32) {
    %c0_i32 = arith.constant 0 : i32
    %c0_i32_0 = arith.constant 0 : i32
    %c0_i32_1 = arith.constant 0 : i32
    return %c0_i32, %c0_i32_0 : i32, i32
  }
  func.func @transform_3(%arg0: i32) -> (i32, i32) {
    %c0_i32 = arith.constant 0 : i32
    %c0_i32_0 = arith.constant 0 : i32
    %c0_i32_1 = arith.constant 0 : i32
    return %c0_i32, %c0_i32_0 : i32, i32
  }
  func.func @transform_4(%arg0: i32) -> (i32, i32) {
    %c0_i32 = arith.constant 0 : i32
    %c0_i32_0 = arith.constant 0 : i32
    %c0_i32_1 = arith.constant 0 : i32
    return %c0_i32, %c0_i32_0 : i32, i32
  }
  func.func @transform_5(%arg0: i32) -> (i32, i32) {
    %c0_i32 = arith.constant 0 : i32
    %c0_i32_0 = arith.constant 0 : i32
    return %arg0, %c0_i32 : i32, i32
  }
}

</mosaic_0001>

<llo_original>
// kernel: tpu_custom_call.1
$region0: #{tpu_custom_call.1}
  #allocation0 [shape = 'u32[]', space=smem, size = 0x4, offset = 0x4, fixed_abs, tag = 'smem constant byte address 0x4 - core index']
  #allocation1 [shape = 'u32[144,128]{1,0:T(1,128)}', space=vmem, size = 0x12000, scoped, tag = 'internal scratch']
  %s0 = inlined_call_operand.vmem [shape: f32[8,784], index: 0, kind: input, shape index: {}]
  %s1 = inlined_call_operand.hbm [shape: f32[784,128], index: 1, kind: input, shape index: {}]
  %s2 = inlined_call_operand.vmem [shape: f32[1,128], index: 2, kind: input, shape index: {}]
  %s3 = inlined_call_operand.vmem [shape: f32[128,10], index: 3, kind: input, shape index: {}]
  %s4 = inlined_call_operand.vmem [shape: f32[1,10], index: 4, kind: input, shape index: {}]
  %s5 = inlined_call_operand.hbm [shape: f32[8,10], index: 5, kind: output, shape index: {}]
  %s6 = sld [smem:[#allocation0]]
  $region34: #{tpu_custom_call.1} parent=0
    _
  %s8 = ssub.s32 1, %s6
  %s9 = scalar_select 0, %s8, %s6
  $region1: #{tpu_custom_call.1} parent=0
    #allocation2 [shape = 'u8[401408]{0}', space=vmem, size = 0x62000, scoped, tag = 'input window, operand 1, single buffered']
    #allocation3 [shape = 's32[1]{0}', space=sflag, size = 0x4, scoped, tag = 'scoped memory for tpu_custom_call.1']
    #allocation4 [shape = 's32[1]{0}', space=sflag, size = 0x4, scoped, tag = 'scoped memory for tpu_custom_call.1']
    #allocation5 [shape = 'u8[4096]{0}', space=vmem, size = 0x1000, scoped, tag = 'output window, operand 0, single buffered']
    %10 = vsyncpa [#allocation3], 0
    %11 = vsyncpa [#allocation4], 0
    // Predicated region
    $region2: #{tpu_custom_call.1} parent=1 // pred_check
      _
    $region3: #{tpu_custom_call.1} parent=1 // pred_check_branch
      %13 = sbr.rel (0) target = $region5
    $region4: #{tpu_custom_call.1} parent=1 // pred_region
      _
    $region5: #{tpu_custom_call.1} parent=1 // pred_fallthru
      _
    // Predicated region
    $region6: #{tpu_custom_call.1} parent=1 // pred_check
      _
    $region7: #{tpu_custom_call.1} parent=1 // pred_check_branch
      %15 = sbr.rel (0) target = $region9
    $region8: #{tpu_custom_call.1} parent=1 // pred_region
      %s17 = ssub.s32 12544, 12544
      %18 = vsyncadd [#allocation3], %s17
      %s19 = sshll.u32 [#allocation2], 4
      %s20 = int_to_ptr.vmem [resolvable:$true] %s19
      %25 = dma.hbm_to_vmem [thread:$0]  %s1, 12544, %s20, [#allocation3], 128, 128, 8
    $region9: #{tpu_custom_call.1} parent=1 // pred_fallthru
      _
    // Predicated region
    $region10: #{tpu_custom_call.1} parent=1 // pred_check
      _
    $region11: #{tpu_custom_call.1} parent=1 // pred_check_branch
      %27 = sbr.rel (0) target = $region13
    $region12: #{tpu_custom_call.1} parent=1 // pred_region
      _
    $region13: #{tpu_custom_call.1} parent=1 // pred_fallthru
      _
    // Predicated region
    $region14: #{tpu_custom_call.1} parent=1 // pred_check
      _
    $region15: #{tpu_custom_call.1} parent=1 // pred_check_branch
      %29 = sbr.rel (0) target = $region17
    $region16: #{tpu_custom_call.1} parent=1 // pred_region
      _
    $region17: #{tpu_custom_call.1} parent=1 // pred_fallthru
      _
    // Predicated region
    $region18: #{tpu_custom_call.1} parent=1 // pred_check
      _
    $region19: #{tpu_custom_call.1} parent=1 // pred_check_branch
      %31 = sbr.rel (0) target = $region21
    $region20: #{tpu_custom_call.1} parent=1 // pred_region
      _
    $region21: #{tpu_custom_call.1} parent=1 // pred_fallthru
      _
    // Predicated region
    $region22: #{tpu_custom_call.1} parent=1 // pred_check
      _
    $region23: #{tpu_custom_call.1} parent=1 // pred_check_branch
      %33 = sbr.rel (0) target = $region25
    $region24: #{tpu_custom_call.1} parent=1 // pred_region
      %34 = dma.done [#allocation3], 12544
    $region25: #{tpu_custom_call.1} parent=1 // pred_fallthru
      _
    %v35 = vld [vmem:[%s0] sm:$0xff]
    %v36 = vld [vmem:[%s0 + $0x8] sm:$0xff]
    %v37 = vld [vmem:[%s0 + $0x10] sm:$0xff]
    %v38 = vld [vmem:[%s0 + $0x18] sm:$0xff]
    %v39 = vld [vmem:[%s0 + $0x20] sm:$0xff]
    %v40 = vld [vmem:[%s0 + $0x28] sm:$0xff]
    %v41 = vld [vmem:[%s0 + $0x30] sm:$0xff]
    %v42 = vld [vmem:[#allocation2] sm:$0xff]
    %v43 = vld [vmem:[#allocation2 + $0x8] sm:$0xff]
    %v44 = vld [vmem:[#allocation2 + $0x10] sm:$0xff]
    %v45 = vld [vmem:[#allocation2 + $0x18] sm:$0xff]
    %v46 = vld [vmem:[#allocation2 + $0x20] sm:$0xff]
    %v47 = vld [vmem:[#allocation2 + $0x28] sm:$0xff]
    %v48 = vld [vmem:[#allocation2 + $0x30] sm:$0xff]
    %v49 = vld [vmem:[#allocation2 + $0x38] sm:$0xff]
    %v50 = vld [vmem:[#allocation2 + $0x40] sm:$0xff]
    %v51 = vld [vmem:[#allocation2 + $0x48] sm:$0xff]
    %v52 = vld [vmem:[#allocation2 + $0x50] sm:$0xff]
    %v53 = vld [vmem:[#allocation2 + $0x58] sm:$0xff]
    %v54 = vld [vmem:[#allocation2 + $0x60] sm:$0xff]
    %v55 = vld [vmem:[#allocation2 + $0x68] sm:$0xff]
    %v56 = vld [vmem:[#allocation2 + $0x70] sm:$0xff]
    %v57 = vld [vmem:[#allocation2 + $0x78] sm:$0xff]
    %v58 = vld [vmem:[#allocation2 + $0x80] sm:$0xff]
    %v59 = vld [vmem:[#allocation2 + $0x88] sm:$0xff]
    %v60 = vld [vmem:[#allocation2 + $0x90] sm:$0xff]
    %v61 = vld [vmem:[#allocation2 + $0x98] sm:$0xff]
    %v62 = vld [vmem:[#allocation2 + $0xa0] sm:$0xff]
    %v63 = vld [vmem:[#allocation2 + $0xa8] sm:$0xff]
    %v64 = vld [vmem:[#allocation2 + $0xb0] sm:$0xff]
    %v65 = vld [vmem:[#allocation2 + $0xb8] sm:$0xff]
    %v66 = vld [vmem:[#allocation2 + $0xc0] sm:$0xff]
    %v67 = vld [vmem:[#allocation2 + $0xc8] sm:$0xff]
    %v68 = vld [vmem:[#allocation2 + $0xd0] sm:$0xff]
    %v69 = vld [vmem:[#allocation2 + $0xd8] sm:$0xff]
    %v70 = vld [vmem:[#allocation2 + $0xe0] sm:$0xff]
    %v71 = vld [vmem:[#allocation2 + $0xe8] sm:$0xff]
    %v72 = vld [vmem:[#allocation2 + $0xf0] sm:$0xff]
    %v73 = vld [vmem:[#allocation2 + $0xf8] sm:$0xff]
    %v74 = vld [vmem:[#allocation2 + $0x100] sm:$0xff]
    %v75 = vld [vmem:[#allocation2 + $0x108] sm:$0xff]
    %v76 = vld [vmem:[#allocation2 + $0x110] sm:$0xff]
    %v77 = vld [vmem:[#allocation2 + $0x118] sm:$0xff]
    %v78 = vld [vmem:[#allocation2 + $0x120] sm:$0xff]
    %v79 = vld [vmem:[#allocation2 + $0x128] sm:$0xff]
    %v80 = vld [vmem:[#allocation2 + $0x130] sm:$0xff]
    %v81 = vld [vmem:[#allocation2 + $0x138] sm:$0xff]
    %v82 = vld [vmem:[#allocation2 + $0x140] sm:$0xff]
    %v83 = vld [vmem:[#allocation2 + $0x148] sm:$0xff]
    %v84 = vld [vmem:[#allocation2 + $0x150] sm:$0xff]
    %v85 = vld [vmem:[#allocation2 + $0x158] sm:$0xff]
    %v86 = vld [vmem:[#allocation2 + $0x160] sm:$0xff]
    %v87 = vld [vmem:[#allocation2 + $0x168] sm:$0xff]
    %v88 = vld [vmem:[#allocation2 + $0x170] sm:$0xff]
    %v89 = vld [vmem:[#allocation2 + $0x178] sm:$0xff]
    %v90 = vld [vmem:[#allocation2 + $0x180] sm:$0xff]
    %v91 = vld [vmem:[#allocation2 + $0x188] sm:$0xff]
    %v92 = vld [vmem:[#allocation2 + $0x190] sm:$0xff]
    %v93 = vld [vmem:[#allocation2 + $0x198] sm:$0xff]
    %v94 = vld [vmem:[#allocation2 + $0x1a0] sm:$0xff]
    %v95 = vld [vmem:[#allocation2 + $0x1a8] sm:$0xff]
    %v96 = vld [vmem:[#allocation2 + $0x1b0] sm:$0xff]
    %v97 = vld [vmem:[#allocation2 + $0x1b8] sm:$0xff]
    %v98 = vld [vmem:[#allocation2 + $0x1c0] sm:$0xff]
    %v99 = vld [vmem:[#allocation2 + $0x1c8] sm:$0xff]
    %v100 = vld [vmem:[#allocation2 + $0x1d0] sm:$0xff]
    %v101 = vld [vmem:[#allocation2 + $0x1d8] sm:$0xff]
    %v102 = vld [vmem:[#allocation2 + $0x1e0] sm:$0xff]
    %v103 = vld [vmem:[#allocation2 + $0x1e8] sm:$0xff]
    %v104 = vld [vmem:[#allocation2 + $0x1f0] sm:$0xff]
    %v105 = vld [vmem:[#allocation2 + $0x1f8] sm:$0xff]
    %v106 = vld [vmem:[#allocation2 + $0x200] sm:$0xff]
    %v107 = vld [vmem:[#allocation2 + $0x208] sm:$0xff]
    %v108 = vld [vmem:[#allocation2 + $0x210] sm:$0xff]
    %v109 = vld [vmem:[#allocation2 + $0x218] sm:$0xff]
    %v110 = vld [vmem:[#allocation2 + $0x220] sm:$0xff]
    %v111 = vld [vmem:[#allocation2 + $0x228] sm:$0xff]
    %v112 = vld [vmem:[#allocation2 + $0x230] sm:$0xff]
    %v113 = vld [vmem:[#allocation2 + $0x238] sm:$0xff]
    %v114 = vld [vmem:[#allocation2 + $0x240] sm:$0xff]
    %v115 = vld [vmem:[#allocation2 + $0x248] sm:$0xff]
    %v116 = vld [vmem:[#allocation2 + $0x250] sm:$0xff]
    %v117 = vld [vmem:[#allocation2 + $0x258] sm:$0xff]
    %v118 = vld [vmem:[#allocation2 + $0x260] sm:$0xff]
    %v119 = vld [vmem:[#allocation2 + $0x268] sm:$0xff]
    %v120 = vld [vmem:[#allocation2 + $0x270] sm:$0xff]
    %v121 = vld [vmem:[#allocation2 + $0x278] sm:$0xff]
    %v122 = vld [vmem:[#allocation2 + $0x280] sm:$0xff]
    %v123 = vld [vmem:[#allocation2 + $0x288] sm:$0xff]
    %v124 = vld [vmem:[#allocation2 + $0x290] sm:$0xff]
    %v125 = vld [vmem:[#allocation2 + $0x298] sm:$0xff]
    %v126 = vld [vmem:[#allocation2 + $0x2a0] sm:$0xff]
    %v127 = vld [vmem:[#allocation2 + $0x2a8] sm:$0xff]
    %v128 = vld [vmem:[#allocation2 + $0x2b0] sm:$0xff]
    %v129 = vld [vmem:[#allocation2 + $0x2b8] sm:$0xff]
    %v130 = vld [vmem:[#allocation2 + $0x2c0] sm:$0xff]
    %v131 = vld [vmem:[#allocation2 + $0x2c8] sm:$0xff]
    %v132 = vld [vmem:[#allocation2 + $0x2d0] sm:$0xff]
    %v133 = vld [vmem:[#allocation2 + $0x2d8] sm:$0xff]
    %v134 = vld [vmem:[#allocation2 + $0x2e0] sm:$0xff]
    %v135 = vld [vmem:[#allocation2 + $0x2e8] sm:$0xff]
    %v136 = vld [vmem:[#allocation2 + $0x2f0] sm:$0xff]
    %v137 = vld [vmem:[#allocation2 + $0x2f8] sm:$0xff]
    %v138 = vld [vmem:[#allocation2 + $0x300] sm:$0xff]
    %v139 = vld [vmem:[#allocation2 + $0x308] sm:$0xff]
    %v140 = vld [vmem:[%s2] sm:$0x1]
    %v142 = vlaneseq
    %v143 = vshrl.u32 %v142, 7
    %v144 = vsub.s32 0, %v143
    %v145 = vrot.slane %v140, %v144
    %vm147 = vcmask 130048
    %v149 = vsel %vm147, %v41, 0
    %151 = vmatprep.subr.mxu0 0.0
    %152 = vmatpush1.msra.mxu0 %v42
    %153 = vmatprep.subr.mxu0 0.0
    %154 = vmatpush1.msra.mxu0 %v43
    %155 = vmatprep.subr.mxu0 0.0
    %156 = vmatpush1.msra.mxu0 %v44
    %157 = vmatprep.subr.mxu0 0.0
    %158 = vmatpush1.msra.mxu0 %v45
    %159 = vmatprep.subr.mxu0 0.0
    %160 = vmatpush1.msra.mxu0 %v46
    %161 = vmatprep.subr.mxu0 0.0
    %162 = vmatpush1.msra.mxu0 %v47
    %163 = vmatprep.subr.mxu0 0.0
    %164 = vmatpush1.msra.mxu0 %v48
    %165 = vmatprep.subr.mxu0 0.0
    %166 = vmatpush1.msra.mxu0 %v49
    %167 = vmatprep.subr.mxu0 0.0
    %168 = vmatpush1.msra.mxu0 %v50
    %169 = vmatprep.subr.mxu0 0.0
    %170 = vmatpush1.msra.mxu0 %v51
    %171 = vmatprep.subr.mxu0 0.0
    %172 = vmatpush1.msra.mxu0 %v52
    %173 = vmatprep.subr.mxu0 0.0
    %174 = vmatpush1.msra.mxu0 %v53
    %175 = vmatprep.subr.mxu0 0.0
    %176 = vmatpush1.msra.mxu0 %v54
    %177 = vmatprep.subr.mxu0 0.0
    %178 = vmatpush1.msra.mxu0 %v55
    %179 = vmatprep.subr.mxu0 0.0
    %180 = vmatpush1.msra.mxu0 %v56
    %181 = vmatprep.subr.mxu0 0.0
    %182 = vmatpush1.msra.mxu0 %v57
    %183 = vmatprep.subr.mxu0 0.0
    %184 = vmatpush1.msra.mxu0 %v58
    %185 = vmatprep.subr.mxu0 0.0
    %186 = vmatpush1.msra.mxu0 %v59
    %187 = vmatprep.subr.mxu0 0.0
    %188 = vmatpush1.msra.mxu0 %v60
    %189 = vmatprep.subr.mxu0 0.0
    %190 = vmatpush1.msra.mxu0 %v61
    %191 = vmatprep.subr.mxu0 0.0
    %192 = vmatpush1.msra.mxu0 %v62
    %193 = vmatprep.subr.mxu0 0.0
    %194 = vmatpush1.msra.mxu0 %v63
    %195 = vmatprep.subr.mxu0 0.0
    %196 = vmatpush1.msra.mxu0 %v64
    %197 = vmatprep.subr.mxu0 0.0
    %198 = vmatpush1.msra.mxu0 %v65
    %199 = vmatprep.subr.mxu0 0.0
    %200 = vmatpush1.msra.mxu0 %v66
    %201 = vmatprep.subr.mxu0 0.0
    %202 = vmatpush1.msra.mxu0 %v67
    %203 = vmatprep.subr.mxu0 0.0
    %204 = vmatpush1.msra.mxu0 %v68
    %205 = vmatprep.subr.mxu0 0.0
    %206 = vmatpush1.msra.mxu0 %v69
    %207 = vmatprep.subr.mxu0 0.0
    %208 = vmatpush1.msra.mxu0 %v70
    %209 = vmatprep.subr.mxu0 0.0
    %210 = vmatpush1.msra.mxu0 %v71
    %211 = vmatprep.subr.mxu0 0.0
    %212 = vmatpush1.msra.mxu0 %v72
    %213 = vmatprep.subr.mxu0 0.0
    %214 = vmatpush1.msra.mxu0 %v73
    %215 = vmatprep.mubr.f32.mxu0 %v36
    %216 = vmatmul.mubr.f32.gmra.mrb[0].mxu0 %v35
    %v217 = vpop.f32.mrb[0].mxu0
    %v218 = vadd.f32 %v145, %v217
    %v219 = vpop.f32.mrb[0].mxu0
    %220 = vdwg.mxu0
    %221 = vmatprep.subr.mxu0 0.0
    %222 = vmatpush1.msra.mxu0 %v74
    %223 = vmatprep.subr.mxu0 0.0
    %224 = vmatpush1.msra.mxu0 %v75
    %225 = vmatprep.subr.mxu0 0.0
    %226 = vmatpush1.msra.mxu0 %v76
    %227 = vmatprep.subr.mxu0 0.0
    %228 = vmatpush1.msra.mxu0 %v77
    %229 = vmatprep.subr.mxu0 0.0
    %230 = vmatpush1.msra.mxu0 %v78
    %231 = vmatprep.subr.mxu0 0.0
    %232 = vmatpush1.msra.mxu0 %v79
    %233 = vmatprep.subr.mxu0 0.0
    %234 = vmatpush1.msra.mxu0 %v80
    %235 = vmatprep.subr.mxu0 0.0
    %236 = vmatpush1.msra.mxu0 %v81
    %237 = vmatprep.subr.mxu0 0.0
    %238 = vmatpush1.msra.mxu0 %v82
    %239 = vmatprep.subr.mxu0 0.0
    %240 = vmatpush1.msra.mxu0 %v83
    %241 = vmatprep.subr.mxu0 0.0
    %242 = vmatpush1.msra.mxu0 %v84
    %243 = vmatprep.subr.mxu0 0.0
    %244 = vmatpush1.msra.mxu0 %v85
    %245 = vmatprep.subr.mxu0 0.0
    %246 = vmatpush1.msra.mxu0 %v86
    %247 = vmatprep.subr.mxu0 0.0
    %248 = vmatpush1.msra.mxu0 %v87
    %249 = vmatprep.subr.mxu0 0.0
    %250 = vmatpush1.msra.mxu0 %v88
    %251 = vmatprep.subr.mxu0 0.0
    %252 = vmatpush1.msra.mxu0 %v89
    %253 = vmatprep.subr.mxu0 0.0
    %254 = vmatpush1.msra.mxu0 %v90
    %255 = vmatprep.subr.mxu0 0.0
    %256 = vmatpush1.msra.mxu0 %v91
    %257 = vmatprep.subr.mxu0 0.0
    %258 = vmatpush1.msra.mxu0 %v92
    %259 = vmatprep.subr.mxu0 0.0
    %260 = vmatpush1.msra.mxu0 %v93
    %261 = vmatprep.subr.mxu0 0.0
    %262 = vmatpush1.msra.mxu0 %v94
    %263 = vmatprep.subr.mxu0 0.0
    %264 = vmatpush1.msra.mxu0 %v95
    %265 = vmatprep.subr.mxu0 0.0
    %266 = vmatpush1.msra.mxu0 %v96
    %267 = vmatprep.subr.mxu0 0.0
    %268 = vmatpush1.msra.mxu0 %v97
    %269 = vmatprep.subr.mxu0 0.0
    %270 = vmatpush1.msra.mxu0 %v98
    %271 = vmatprep.subr.mxu0 0.0
    %272 = vmatpush1.msra.mxu0 %v99
    %273 = vmatprep.subr.mxu0 0.0
    %274 = vmatpush1.msra.mxu0 %v100
    %275 = vmatprep.subr.mxu0 0.0
    %276 = vmatpush1.msra.mxu0 %v101
    %277 = vmatprep.subr.mxu0 0.0
    %278 = vmatpush1.msra.mxu0 %v102
    %279 = vmatprep.subr.mxu0 0.0
    %280 = vmatpush1.msra.mxu0 %v103
    %281 = vmatprep.subr.mxu0 0.0
    %282 = vmatpush1.msra.mxu0 %v104
    %283 = vmatprep.subr.mxu0 0.0
    %284 = vmatpush1.msra.mxu0 %v105
    %285 = vmatprep.mubr.f32.mxu0 %v38
    %286 = vmatmul.mubr.f32.gmra.mrb[0].mxu0 %v37
    %v287 = vpop.f32.mrb[0].mxu0
    %v288 = vadd.f32 %v218, %v287
    %v289 = vpop.f32.mrb[0].mxu0
    %290 = vdwg.mxu0
    %291 = vmatprep.subr.mxu0 0.0
    %292 = vmatpush1.msra.mxu0 %v106
    %293 = vmatprep.subr.mxu0 0.0
    %294 = vmatpush1.msra.mxu0 %v107
    %295 = vmatprep.subr.mxu0 0.0
    %296 = vmatpush1.msra.mxu0 %v108
    %297 = vmatprep.subr.mxu0 0.0
    %298 = vmatpush1.msra.mxu0 %v109
    %299 = vmatprep.subr.mxu0 0.0
    %300 = vmatpush1.msra.mxu0 %v110
    %301 = vmatprep.subr.mxu0 0.0
    %302 = vmatpush1.msra.mxu0 %v111
    %303 = vmatprep.subr.mxu0 0.0
    %304 = vmatpush1.msra.mxu0 %v112
    %305 = vmatprep.subr.mxu0 0.0
    %306 = vmatpush1.msra.mxu0 %v113
    %307 = vmatprep.subr.mxu0 0.0
    %308 = vmatpush1.msra.mxu0 %v114
    %309 = vmatprep.subr.mxu0 0.0
    %310 = vmatpush1.msra.mxu0 %v115
    %311 = vmatprep.subr.mxu0 0.0
    %312 = vmatpush1.msra.mxu0 %v116
    %313 = vmatprep.subr.mxu0 0.0
    %314 = vmatpush1.msra.mxu0 %v117
    %315 = vmatprep.subr.mxu0 0.0
    %316 = vmatpush1.msra.mxu0 %v118
    %317 = vmatprep.subr.mxu0 0.0
    %318 = vmatpush1.msra.mxu0 %v119
    %319 = vmatprep.subr.mxu0 0.0
    %320 = vmatpush1.msra.mxu0 %v120
    %321 = vmatprep.subr.mxu0 0.0
    %322 = vmatpush1.msra.mxu0 %v121
    %323 = vmatprep.subr.mxu0 0.0
    %324 = vmatpush1.msra.mxu0 %v122
    %325 = vmatprep.subr.mxu0 0.0
    %326 = vmatpush1.msra.mxu0 %v123
    %327 = vmatprep.subr.mxu0 0.0
    %328 = vmatpush1.msra.mxu0 %v124
    %329 = vmatprep.subr.mxu0 0.0
    %330 = vmatpush1.msra.mxu0 %v125
    %331 = vmatprep.subr.mxu0 0.0
    %332 = vmatpush1.msra.mxu0 %v126
    %333 = vmatprep.subr.mxu0 0.0
    %334 = vmatpush1.msra.mxu0 %v127
    %335 = vmatprep.subr.mxu0 0.0
    %336 = vmatpush1.msra.mxu0 %v128
    %337 = vmatprep.subr.mxu0 0.0
    %338 = vmatpush1.msra.mxu0 %v129
    %339 = vmatprep.subr.mxu0 0.0
    %340 = vmatpush1.msra.mxu0 %v130
    %341 = vmatprep.subr.mxu0 0.0
    %342 = vmatpush1.msra.mxu0 %v131
    %343 = vmatprep.subr.mxu0 0.0
    %344 = vmatpush1.msra.mxu0 %v132
    %345 = vmatprep.subr.mxu0 0.0
    %346 = vmatpush1.msra.mxu0 %v133
    %347 = vmatprep.subr.mxu0 0.0
    %348 = vmatpush1.msra.mxu0 %v134
    %349 = vmatprep.subr.mxu0 0.0
    %350 = vmatpush1.msra.mxu0 %v135
    %351 = vmatprep.subr.mxu0 0.0
    %352 = vmatpush1.msra.mxu0 %v136
    %353 = vmatprep.subr.mxu0 0.0
    %354 = vmatpush1.msra.mxu0 %v137
    %355 = vmatprep.mubr.f32.mxu0 %v40
    %356 = vmatmul.mubr.f32.gmra.mrb[0].mxu0 %v39
    %v357 = vpop.f32.mrb[0].mxu0
    %v358 = vadd.f32 %v288, %v357
    %v359 = vpop.f32.mrb[0].mxu0
    %360 = vdwg.mxu0
    %361 = vmatprep.subr.mxu0 0.0
    %362 = vmatpush1.msra.mxu0 %v138
    %363 = vmatprep.subr.mxu0 0.0
    %364 = vmatpush1.msra.mxu0 %v139
    %365 = vmatprep.subr.mxu0 0.0
    %366 = vmatpush1.msra.mxu0 0.0
    %367 = vmatprep.subr.mxu0 0.0
    %368 = vmatpush1.msra.mxu0 0.0
    %369 = vmatprep.subr.mxu0 0.0
    %370 = vmatpush1.msra.mxu0 0.0
    %371 = vmatprep.subr.mxu0 0.0
    %372 = vmatpush1.msra.mxu0 0.0
    %373 = vmatprep.subr.mxu0 0.0
    %374 = vmatpush1.msra.mxu0 0.0
    %375 = vmatprep.subr.mxu0 0.0
    %376 = vmatpush1.msra.mxu0 0.0
    %377 = vmatprep.subr.mxu0 0.0
    %378 = vmatpush1.msra.mxu0 0.0
    %379 = vmatprep.subr.mxu0 0.0
    %380 = vmatpush1.msra.mxu0 0.0
    %381 = vmatprep.subr.mxu0 0.0
    %382 = vmatpush1.msra.mxu0 0.0
    %383 = vmatprep.subr.mxu0 0.0
    %384 = vmatpush1.msra.mxu0 0.0
    %385 = vmatprep.subr.mxu0 0.0
    %386 = vmatpush1.msra.mxu0 0.0
    %387 = vmatprep.subr.mxu0 0.0
    %388 = vmatpush1.msra.mxu0 0.0
    %389 = vmatprep.subr.mxu0 0.0
    %390 = vmatpush1.msra.mxu0 0.0
    %391 = vmatprep.subr.mxu0 0.0
    %392 = vmatpush1.msra.mxu0 0.0
    %393 = vmatprep.subr.mxu0 0.0
    %394 = vmatpush1.msra.mxu0 0.0
    %395 = vmatprep.subr.mxu0 0.0
    %396 = vmatpush1.msra.mxu0 0.0
    %397 = vmatprep.subr.mxu0 0.0
    %398 = vmatpush1.msra.mxu0 0.0
    %399 = vmatprep.subr.mxu0 0.0
    %400 = vmatpush1.msra.mxu0 0.0
    %401 = vmatprep.subr.mxu0 0.0
    %402 = vmatpush1.msra.mxu0 0.0
    %403 = vmatprep.subr.mxu0 0.0
    %404 = vmatpush1.msra.mxu0 0.0
    %405 = vmatprep.subr.mxu0 0.0
    %406 = vmatpush1.msra.mxu0 0.0
    %407 = vmatprep.subr.mxu0 0.0
    %408 = vmatpush1.msra.mxu0 0.0
    %409 = vmatprep.subr.mxu0 0.0
    %410 = vmatpush1.msra.mxu0 0.0
    %411 = vmatprep.subr.mxu0 0.0
    %412 = vmatpush1.msra.mxu0 0.0
    %413 = vmatprep.subr.mxu0 0.0
    %414 = vmatpush1.msra.mxu0 0.0
    %415 = vmatprep.subr.mxu0 0.0
    %416 = vmatpush1.msra.mxu0 0.0
    %417 = vmatprep.subr.mxu0 0.0
    %418 = vmatpush1.msra.mxu0 0.0
    %419 = vmatprep.subr.mxu0 0.0
    %420 = vmatpush1.msra.mxu0 0.0
    %421 = vmatprep.subr.mxu0 0.0
    %422 = vmatpush1.msra.mxu0 0.0
    %423 = vmatprep.subr.mxu0 0.0
    %424 = vmatpush1.msra.mxu0 0.0
    %425 = vmatprep.mubr.f32.mxu0 0.0
    %426 = vmatmul.mubr.f32.gmra.mrb[0].mxu0 %v149
    %v427 = vpop.f32.mrb[0].mxu0
    %v428 = vadd.f32 %v358, %v427
    %v429 = vpop.f32.mrb[0].mxu0
    %430 = vdwg.mxu0
    %v431 = vmax.f32 %v428, 0.0
    %v432 = vld [vmem:[%s3] sm:$0xff]
    %v433 = vld [vmem:[%s3 + $0x8] sm:$0xff]
    %v434 = vld [vmem:[%s3 + $0x10] sm:$0xff]
    %v435 = vld [vmem:[%s3 + $0x18] sm:$0xff]
    %v436 = vld [vmem:[%s3 + $0x20] sm:$0xff]
    %v437 = vld [vmem:[%s3 + $0x28] sm:$0xff]
    %v438 = vld [vmem:[%s3 + $0x30] sm:$0xff]
    %v439 = vld [vmem:[%s3 + $0x38] sm:$0xff]
    %v440 = vld [vmem:[%s3 + $0x40] sm:$0xff]
    %v441 = vld [vmem:[%s3 + $0x48] sm:$0xff]
    %v442 = vld [vmem:[%s3 + $0x50] sm:$0xff]
    %v443 = vld [vmem:[%s3 + $0x58] sm:$0xff]
    %v444 = vld [vmem:[%s3 + $0x60] sm:$0xff]
    %v445 = vld [vmem:[%s3 + $0x68] sm:$0xff]
    %v446 = vld [vmem:[%s3 + $0x70] sm:$0xff]
    %v447 = vld [vmem:[%s3 + $0x78] sm:$0xff]
    %v448 = vld [vmem:[%s4] sm:$0x1]
    %v450 = vlaneseq
    %v451 = vshrl.u32 %v450, 7
    %v452 = vsub.s32 0, %v451
    %v453 = vrot.slane %v448, %v452
    %455 = vmatprep.subr.mxu0 0.0
    %456 = vmatpush1.msra.mxu0 %v432
    %457 = vmatprep.subr.mxu0 0.0
    %458 = vmatpush1.msra.mxu0 %v433
    %459 = vmatprep.subr.mxu0 0.0
    %460 = vmatpush1.msra.mxu0 %v434
    %461 = vmatprep.subr.mxu0 0.0
    %462 = vmatpush1.msra.mxu0 %v435
    %463 = vmatprep.subr.mxu0 0.0
    %464 = vmatpush1.msra.mxu0 %v436
    %465 = vmatprep.subr.mxu0 0.0
    %466 = vmatpush1.msra.mxu0 %v437
    %467 = vmatprep.subr.mxu0 0.0
    %468 = vmatpush1.msra.mxu0 %v438
    %469 = vmatprep.subr.mxu0 0.0
    %470 = vmatpush1.msra.mxu0 %v439
    %471 = vmatprep.subr.mxu0 0.0
    %472 = vmatpush1.msra.mxu0 %v440
    %473 = vmatprep.subr.mxu0 0.0
    %474 = vmatpush1.msra.mxu0 %v441
    %475 = vmatprep.subr.mxu0 0.0
    %476 = vmatpush1.msra.mxu0 %v442
    %477 = vmatprep.subr.mxu0 0.0
    %478 = vmatpush1.msra.mxu0 %v443
    %479 = vmatprep.subr.mxu0 0.0
    %480 = vmatpush1.msra.mxu0 %v444
    %481 = vmatprep.subr.mxu0 0.0
    %482 = vmatpush1.msra.mxu0 %v445
    %483 = vmatprep.subr.mxu0 0.0
    %484 = vmatpush1.msra.mxu0 %v446
    %485 = vmatprep.subr.mxu0 0.0
    %486 = vmatpush1.msra.mxu0 %v447
    %487 = vmatprep.subr.mxu0 0.0
    %488 = vmatpush1.msra.mxu0 0.0
    %489 = vmatprep.subr.mxu0 0.0
    %490 = vmatpush1.msra.mxu0 0.0
    %491 = vmatprep.subr.mxu0 0.0
    %492 = vmatpush1.msra.mxu0 0.0
    %493 = vmatprep.subr.mxu0 0.0
    %494 = vmatpush1.msra.mxu0 0.0
    %495 = vmatprep.subr.mxu0 0.0
    %496 = vmatpush1.msra.mxu0 0.0
    %497 = vmatprep.subr.mxu0 0.0
    %498 = vmatpush1.msra.mxu0 0.0
    %499 = vmatprep.subr.mxu0 0.0
    %500 = vmatpush1.msra.mxu0 0.0
    %501 = vmatprep.subr.mxu0 0.0
    %502 = vmatpush1.msra.mxu0 0.0
    %503 = vmatprep.subr.mxu0 0.0
    %504 = vmatpush1.msra.mxu0 0.0
    %505 = vmatprep.subr.mxu0 0.0
    %506 = vmatpush1.msra.mxu0 0.0
    %507 = vmatprep.subr.mxu0 0.0
    %508 = vmatpush1.msra.mxu0 0.0
    %509 = vmatprep.subr.mxu0 0.0
    %510 = vmatpush1.msra.mxu0 0.0
    %511 = vmatprep.subr.mxu0 0.0
    %512 = vmatpush1.msra.mxu0 0.0
    %513 = vmatprep.subr.mxu0 0.0
    %514 = vmatpush1.msra.mxu0 0.0
    %515 = vmatprep.subr.mxu0 0.0
    %516 = vmatpush1.msra.mxu0 0.0
    %517 = vmatprep.subr.mxu0 0.0
    %518 = vmatpush1.msra.mxu0 0.0
    %519 = vmatprep.mubr.f32.mxu0 0.0
    %520 = vmatmul.mubr.f32.gmra.mrb[0].mxu0 %v431
    %v521 = vpop.f32.mrb[0].mxu0
    %v522 = vadd.f32 %v453, %v521
    %v523 = vpop.f32.mrb[0].mxu0
    %524 = vdwg.mxu0
    %vm525 = vcmask 80896
    %526 = vst.msk [vmem:[#allocation5] sm:$0xff] %vm525, %v522
    // Predicated region
    $region26: #{tpu_custom_call.1} parent=1 // pred_check
      _
    $region27: #{tpu_custom_call.1} parent=1 // pred_check_branch
      %528 = sbr.rel (0) target = $region29
    $region28: #{tpu_custom_call.1} parent=1 // pred_region
      %s530 = ssub.s32 128, 128
      %531 = vsyncadd [#allocation4], %s530
      %s533 = sshll.u32 [#allocation5], 4
      %s534 = int_to_ptr.vmem [resolvable:$true] %s533
      %536 = dma.vmem_to_hbm [thread:$0]  %s534, 128, %s5, [#allocation4]
    $region29: #{tpu_custom_call.1} parent=1 // pred_fallthru
      _
    // Predicated region
    $region30: #{tpu_custom_call.1} parent=1 // pred_check
      _
    $region31: #{tpu_custom_call.1} parent=1 // pred_check_branch
      %538 = sbr.rel (0) target = $region33
    $region32: #{tpu_custom_call.1} parent=1 // pred_region
      %539 = dma.done [#allocation4], 128
    $region33: #{tpu_custom_call.1} parent=1 // pred_fallthru
      _
    %540 = vsyncpa [#allocation3], 1
    %541 = vsyncpa [#allocation4], 1

</llo_original>
